<compile_context>
chip_gen: v7x
topology: tpu7x:2x2x1
jax: 0.10.0
libtpu: 0.0.40
codegen_flags: <defaults>
</compile_context>

<pallas_src>
import functools
import math

import jax
import jax.numpy as jnp
from jax.experimental import pallas as pl
from jax.experimental.pallas import tpu as pltpu


def _round_up(x, m):
    return ((x + m - 1) // m) * m


def _fused_mlp_kernel(x_ref, wa_ref, ba_ref, wb_ref, bb_ref, o_ref, *, act2):
    """One batch tile: act2(ReLU(x @ Wa + ba) @ Wb + bb).

    The hidden activation h stays in VMEM/vregs for the whole body; no
    accumulator scratch and no K-grid axis (feature dims are full-extent
    blocks), so there is no init/finalize branching at all.
    """
    h = jnp.dot(x_ref[...], wa_ref[...], preferred_element_type=jnp.float32)
    h = jnp.maximum(h + ba_ref[...], 0.0)                       # ReLU, layer 1

    y = jnp.dot(h.astype(wb_ref.dtype), wb_ref[...],
                preferred_element_type=jnp.float32)
    y = y + bb_ref[...]
    if act2 == "relu":
        y = jnp.maximum(y, 0.0)
    else:  # "sigmoid"
        y = jax.nn.sigmoid(y)
    o_ref[...] = y.astype(o_ref.dtype)


def _pick_tm(M, K, N, *, cap=512, tile_budget_bytes=24 * 1024 * 1024):
    """Batch-tile size: full batch when small, else a multiple of 8 capped so
    the double-buffered x/out tiles stay well inside scoped VMEM."""
    if M <= cap:
        return M                      # full-extent block; no padding needed
    tm = cap
    while tm > 8 and 2 * 4 * tm * (K + N) > tile_budget_bytes:
        tm //= 2
    return max(tm, 8)


def fused_two_layer(x, w_a, b_a2d, w_b, b_b2d, act2):
    """act2(ReLU(x @ w_a + b_a) @ w_b + b_b) as a single fused Pallas kernel.

    x: (M, K) f32, w_a: (K, H) f32, b_a2d: (1, H), w_b: (H, N) f32, b_b2d: (1, N).
    Weights/biases are passed as full-array blocks (they are tiny for this
    model); only the batch axis is tiled.
    """
    M, K = x.shape
    K2, H = w_a.shape
    H2, N = w_b.shape
    assert K == K2 and H == H2 and b_a2d.shape == (1, H) and b_b2d.shape == (1, N)

    # TODO(synk): feature dims (K, H, N) are assumed to fit in VMEM as full
    # blocks (true for simpleMPL-scale widths); very wide layers would need a
    # K-tiled reduction path.
    tm = _pick_tm(M, K, N)
    Mp = _round_up(M, tm)
    if Mp != M:
        x = jnp.pad(x, ((0, Mp - M), (0, 0)))     # batch pad only (rare path)

    grid = (Mp // tm,)
    kernel = functools.partial(_fused_mlp_kernel, act2=act2)

    out = pl.pallas_call(
        kernel,
        out_shape=jax.ShapeDtypeStruct((Mp, N), x.dtype),
        grid_spec=pltpu.PrefetchScalarGridSpec(
            num_scalar_prefetch=0,
            grid=grid,
            in_specs=[
                pl.BlockSpec((tm, K), lambda i: (i, 0)),   # x batch tile
                pl.BlockSpec((K, H), lambda i: (0, 0)),    # W_a (full array)
                pl.BlockSpec((1, H), lambda i: (0, 0)),    # b_a
                pl.BlockSpec((H, N), lambda i: (0, 0)),    # W_b (full array)
                pl.BlockSpec((1, N), lambda i: (0, 0)),    # b_b
            ],
            out_specs=pl.BlockSpec((tm, N), lambda i: (i, 0)),
        ),
        compiler_params=pltpu.CompilerParams(
            dimension_semantics=("parallel",),             # megacore over batch
            vmem_limit_bytes=32 * 1024 * 1024,
        ),
        cost_estimate=pl.CostEstimate(
            flops=2 * Mp * (K * H + H * N),
            transcendentals=(Mp * N if act2 == "sigmoid" else 0),
            # x and out streamed once; tiny weights/biases re-read per batch tile.
            bytes_accessed=4 * (Mp * K + Mp * N
                                + (Mp // tm) * (K * H + H + H * N + N)),
        ),
    )(x, w_a, b_a2d, w_b, b_b2d)

    return out[:M] if Mp != M else out


class SimpleMPLPallas:
    """JAX/Pallas port of the PyTorch simpleMPL module (forward pass only)."""

    def __init__(self, nInput, nNodes=10, nOutput=5, *, key):
        k1, k2 = jax.random.split(key)
        # nn.Linear weight layout: (out_features, in_features); xavier_uniform_.
        bound1 = math.sqrt(6.0 / (nInput + nNodes))
        bound2 = math.sqrt(6.0 / (nNodes + nOutput))
        self.w1 = jax.random.uniform(k1, (nNodes, nInput), jnp.float32,
                                     -bound1, bound1)      # linear1.weight
        self.w2 = jax.random.uniform(k2, (nOutput, nNodes), jnp.float32,
                                     -bound2, bound2)      # linear2.weight

        # Biases cached as (1, F) rows so no per-call reshape/pad is needed.
        self.b1 = jnp.zeros((1, nNodes), jnp.float32)           # linear1.bias
        self.b2 = jnp.zeros((1, nOutput), jnp.float32)          # linear2.bias
        self.bias_decoder1 = jnp.zeros((1, nInput), jnp.float32)
        self.bias_decoder2 = jnp.zeros((1, nNodes), jnp.float32)

        # Transposed weights cached once: mode-1 path never pays a per-call
        # XLA transpose / HBM materialization.
        self.w1_t = jnp.asarray(self.w1.T)   # (nInput, nNodes)
        self.w2_t = jnp.asarray(self.w2.T)   # (nNodes, nOutput)

    def __call__(self, x, mode=1):
        if mode == 1:
            # ReLU(ReLU(x @ W1^T + b1) @ W2^T + b2), one fused kernel.
            x = fused_two_layer(x, self.w1_t, self.b1,
                                self.w2_t, self.b2, act2="relu")
        if mode == 2:
            # Sigmoid(ReLU(x @ W2 + bD2) @ W1 + bD1), one fused kernel.
            # F.linear(x, W2.t()) == x @ W2 ; F.linear(x, W1.t()) == x @ W1.
            x = fused_two_layer(x, self.w2, self.bias_decoder2,
                                self.w1, self.bias_decoder1, act2="sigmoid")
        return x


if __name__ == "__main__":
    key = jax.random.PRNGKey(0)
    k_model, k_x1, k_x2 = jax.random.split(key, 3)

    nInput, nNodes, nOutput, batch = 32, 10, 5, 8
    model = SimpleMPLPallas(nInput, nNodes, nOutput, key=k_model)

    # mode 1: (batch, nInput) -> (batch, nOutput)
    x1 = jax.random.normal(k_x1, (batch, nInput), dtype=jnp.float32)
    y1 = model(x1, mode=1)
    jax.block_until_ready(y1)

    # mode 2: (batch, nOutput) -> (batch, nInput)
    x2 = jax.random.normal(k_x2, (batch, nOutput), dtype=jnp.float32)
    y2 = model(x2, mode=2)
    jax.block_until_ready(y2)

    # Pure-JAX reference
    hp = jax.lax.Precision.HIGHEST
    h1 = jnp.maximum(jnp.dot(x1, model.w1.T, precision=hp) + model.b1, 0.0)
    r1 = jnp.maximum(jnp.dot(h1, model.w2.T, precision=hp) + model.b2, 0.0)
    h2 = jnp.maximum(jnp.dot(x2, model.w2, precision=hp) + model.bias_decoder2, 0.0)
    r2 = jax.nn.sigmoid(jnp.dot(h2, model.w1, precision=hp) + model.bias_decoder1)

    assert y1.shape == (batch, nOutput)
    assert y2.shape == (batch, nInput)
    assert jnp.allclose(y1, r1, atol=1e-4, rtol=1e-4)
    assert jnp.allclose(y2, r2, atol=1e-4, rtol=1e-4)

    print("KERNEL_OK")
</pallas_src>

<mosaic_0001>
module attributes {stable_mosaic.version = 11 : i64} {
  func.func @_fused_mlp_kernel(%arg0: i32, %arg1: memref<8x32xf32, #tpu.memory_space<vmem>>, %arg2: memref<32x10xf32, #tpu.memory_space<vmem>>, %arg3: memref<1x10xf32, #tpu.memory_space<vmem>>, %arg4: memref<10x5xf32, #tpu.memory_space<vmem>>, %arg5: memref<1x5xf32, #tpu.memory_space<vmem>>, %arg6: memref<8x5xf32, #tpu.memory_space<vmem>>) attributes {dimension_semantics = [#tpu.dimension_semantics<parallel>], iteration_bounds = array<i64: 1>, scalar_prefetch = 0 : i64, scratch_operands = 0 : i64, tpu.core_type = #tpu.core_type<tc>, window_params = [{transform_indices = @transform_0, window_bounds = array<i64: 8, 32>}, {pipeline_mode = #tpu.pipeline_mode<synchronous>, transform_indices = @transform_1, window_bounds = array<i64: 32, 10>}, {pipeline_mode = #tpu.pipeline_mode<synchronous>, transform_indices = @transform_2, window_bounds = array<i64: 1, 10>}, {pipeline_mode = #tpu.pipeline_mode<synchronous>, transform_indices = @transform_3, window_bounds = array<i64: 10, 5>}, {pipeline_mode = #tpu.pipeline_mode<synchronous>, transform_indices = @transform_4, window_bounds = array<i64: 1, 5>}, {transform_indices = @transform_5, window_bounds = array<i64: 8, 5>}]} {
    %c0 = arith.constant 0 : index
    %c0_0 = arith.constant 0 : index
    %0 = vector.load %arg1[%c0, %c0_0] : memref<8x32xf32, #tpu.memory_space<vmem>>, vector<8x32xf32>
    %c0_1 = arith.constant 0 : index
    %c0_2 = arith.constant 0 : index
    %1 = vector.load %arg2[%c0_1, %c0_2] : memref<32x10xf32, #tpu.memory_space<vmem>>, vector<32x10xf32>
    %cst = arith.constant dense<0.000000e+00> : vector<8x10xf32>
    %2 = tpu.matmul %0, %1, %cst {dimension_numbers = #tpu.dot_dimension_numbers<[1], [0], [0], [1], [0, 0, 1, 1], [], []>} : vector<8x32xf32>, vector<32x10xf32>, vector<8x10xf32> -> vector<8x10xf32>
    %c0_3 = arith.constant 0 : index
    %c0_4 = arith.constant 0 : index
    %3 = vector.load %arg3[%c0_3, %c0_4] : memref<1x10xf32, #tpu.memory_space<vmem>>, vector<1x10xf32>
    %4 = vector.broadcast %3 : vector<1x10xf32> to vector<8x10xf32>
    %5 = arith.addf %2, %4 : vector<8x10xf32>
    %cst_5 = arith.constant 0.000000e+00 : f32
    %6 = vector.broadcast %cst_5 : f32 to vector<8x10xf32>
    %7 = arith.maximumf %5, %6 : vector<8x10xf32>
    %c0_6 = arith.constant 0 : index
    %c0_7 = arith.constant 0 : index
    %8 = vector.load %arg4[%c0_6, %c0_7] : memref<10x5xf32, #tpu.memory_space<vmem>>, vector<10x5xf32>
    %cst_8 = arith.constant dense<0.000000e+00> : vector<8x5xf32>
    %9 = tpu.matmul %7, %8, %cst_8 {dimension_numbers = #tpu.dot_dimension_numbers<[1], [0], [0], [1], [0, 0, 1, 1], [], []>} : vector<8x10xf32>, vector<10x5xf32>, vector<8x5xf32> -> vector<8x5xf32>
    %c0_9 = arith.constant 0 : index
    %c0_10 = arith.constant 0 : index
    %10 = vector.load %arg5[%c0_9, %c0_10] : memref<1x5xf32, #tpu.memory_space<vmem>>, vector<1x5xf32>
    %11 = vector.broadcast %10 : vector<1x5xf32> to vector<8x5xf32>
    %12 = arith.addf %9, %11 : vector<8x5xf32>
    %cst_11 = arith.constant 0.000000e+00 : f32
    %13 = vector.broadcast %cst_11 : f32 to vector<8x5xf32>
    %14 = arith.maximumf %12, %13 : vector<8x5xf32>
    %c0_12 = arith.constant 0 : index
    %c0_13 = arith.constant 0 : index
    %15 = vector.load %arg6[%c0_12, %c0_13] : memref<8x5xf32, #tpu.memory_space<vmem>>, vector<8x5xf32>
    tpu.vector_store %arg6[%c0_12, %c0_13], %14 {strides = array<i32>} : memref<8x5xf32, #tpu.memory_space<vmem>>, vector<8x5xf32>,
    return
  }
  func.func @transform_0(%arg0: i32) -> (i32, i32) {
    %c0_i32 = arith.constant 0 : i32
    %c0_i32_0 = arith.constant 0 : i32
    return %arg0, %c0_i32 : i32, i32
  }
  func.func @transform_1(%arg0: i32) -> (i32, i32) {
    %c0_i32 = arith.constant 0 : i32
    %c0_i32_0 = arith.constant 0 : i32
    %c0_i32_1 = arith.constant 0 : i32
    return %c0_i32, %c0_i32_0 : i32, i32
  }
  func.func @transform_2(%arg0: i32) -> (i32, i32) {
    %c0_i32 = arith.constant 0 : i32
    %c0_i32_0 = arith.constant 0 : i32
    %c0_i32_1 = arith.constant 0 : i32
    return %c0_i32, %c0_i32_0 : i32, i32
  }
  func.func @transform_3(%arg0: i32) -> (i32, i32) {
    %c0_i32 = arith.constant 0 : i32
    %c0_i32_0 = arith.constant 0 : i32
    %c0_i32_1 = arith.constant 0 : i32
    return %c0_i32, %c0_i32_0 : i32, i32
  }
  func.func @transform_4(%arg0: i32) -> (i32, i32) {
    %c0_i32 = arith.constant 0 : i32
    %c0_i32_0 = arith.constant 0 : i32
    %c0_i32_1 = arith.constant 0 : i32
    return %c0_i32, %c0_i32_0 : i32, i32
  }
  func.func @transform_5(%arg0: i32) -> (i32, i32) {
    %c0_i32 = arith.constant 0 : i32
    %c0_i32_0 = arith.constant 0 : i32
    return %arg0, %c0_i32 : i32, i32
  }
}

</mosaic_0001>

<llo_original>
// kernel: tpu_custom_call.1
$region0: #{tpu_custom_call.1}
  #allocation0 [shape = 'u32[]', space=smem, size = 0x4, offset = 0x4, fixed_abs, tag = 'smem constant byte address 0x4 - core index']
  #allocation1 [shape = 'u32[144,128]{1,0:T(1,128)}', space=vmem, size = 0x12000, scoped, tag = 'internal scratch']
  %s0 = inlined_call_operand.vmem [shape: f32[8,32], index: 0, kind: input, shape index: {}]
  %s1 = inlined_call_operand.vmem [shape: f32[32,10], index: 1, kind: input, shape index: {}]
  %s2 = inlined_call_operand.vmem [shape: f32[1,10], index: 2, kind: input, shape index: {}]
  %s3 = inlined_call_operand.vmem [shape: f32[10,5], index: 3, kind: input, shape index: {}]
  %s4 = inlined_call_operand.vmem [shape: f32[1,5], index: 4, kind: input, shape index: {}]
  %s5 = inlined_call_operand.hbm [shape: f32[8,5], index: 5, kind: output, shape index: {}]
  %s6 = sld [smem:[#allocation0]]
  $region30: #{tpu_custom_call.1} parent=0
    _
  %s8 = ssub.s32 1, %s6
  %s9 = scalar_select 0, %s8, %s6
  $region1: #{tpu_custom_call.1} parent=0
    #allocation2 [shape = 'u8[4096]{0}', space=vmem, size = 0x1000, scoped, tag = 'output window, operand 0, single buffered']
    #allocation3 [shape = 's32[1]{0}', space=sflag, size = 0x4, scoped, tag = 'scoped memory for tpu_custom_call.1']
    %10 = vsyncpa [#allocation3], 0
    // Predicated region
    $region2: #{tpu_custom_call.1} parent=1 // pred_check
      _
    $region3: #{tpu_custom_call.1} parent=1 // pred_check_branch
      %12 = sbr.rel (0) target = $region5
    $region4: #{tpu_custom_call.1} parent=1 // pred_region
      _
    $region5: #{tpu_custom_call.1} parent=1 // pred_fallthru
      _
    // Predicated region
    $region6: #{tpu_custom_call.1} parent=1 // pred_check
      _
    $region7: #{tpu_custom_call.1} parent=1 // pred_check_branch
      %14 = sbr.rel (0) target = $region9
    $region8: #{tpu_custom_call.1} parent=1 // pred_region
      _
    $region9: #{tpu_custom_call.1} parent=1 // pred_fallthru
      _
    // Predicated region
    $region10: #{tpu_custom_call.1} parent=1 // pred_check
      _
    $region11: #{tpu_custom_call.1} parent=1 // pred_check_branch
      %16 = sbr.rel (0) target = $region13
    $region12: #{tpu_custom_call.1} parent=1 // pred_region
      _
    $region13: #{tpu_custom_call.1} parent=1 // pred_fallthru
      _
    // Predicated region
    $region14: #{tpu_custom_call.1} parent=1 // pred_check
      _
    $region15: #{tpu_custom_call.1} parent=1 // pred_check_branch
      %18 = sbr.rel (0) target = $region17
    $region16: #{tpu_custom_call.1} parent=1 // pred_region
      _
    $region17: #{tpu_custom_call.1} parent=1 // pred_fallthru
      _
    // Predicated region
    $region18: #{tpu_custom_call.1} parent=1 // pred_check
      _
    $region19: #{tpu_custom_call.1} parent=1 // pred_check_branch
      %20 = sbr.rel (0) target = $region21
    $region20: #{tpu_custom_call.1} parent=1 // pred_region
      _
    $region21: #{tpu_custom_call.1} parent=1 // pred_fallthru
      _
    %v21 = vld [vmem:[%s0] sm:$0xff]
    %v22 = vld [vmem:[%s1] sm:$0xff]
    %v23 = vld [vmem:[%s1 + $0x8] sm:$0xff]
    %v24 = vld [vmem:[%s1 + $0x10] sm:$0xff]
    %v25 = vld [vmem:[%s1 + $0x18] sm:$0xff]
    %v26 = vld [vmem:[%s2] sm:$0x1]
    %v28 = vlaneseq
    %v29 = vshrl.u32 %v28, 7
    %v30 = vsub.s32 0, %v29
    %v31 = vrot.slane %v26, %v30
    %vm33 = vcmask 261120
    %v35 = vsel %vm33, %v21, 0
    %37 = vmatprep.subr.mxu0 0.0
    %38 = vmatpush1.msra.mxu0 %v22
    %39 = vmatprep.subr.mxu0 0.0
    %40 = vmatpush1.msra.mxu0 %v23
    %41 = vmatprep.subr.mxu0 0.0
    %42 = vmatpush1.msra.mxu0 %v24
    %43 = vmatprep.subr.mxu0 0.0
    %44 = vmatpush1.msra.mxu0 %v25
    %45 = vmatprep.subr.mxu0 0.0
    %46 = vmatpush1.msra.mxu0 0.0
    %47 = vmatprep.subr.mxu0 0.0
    %48 = vmatpush1.msra.mxu0 0.0
    %49 = vmatprep.subr.mxu0 0.0
    %50 = vmatpush1.msra.mxu0 0.0
    %51 = vmatprep.subr.mxu0 0.0
    %52 = vmatpush1.msra.mxu0 0.0
    %53 = vmatprep.subr.mxu0 0.0
    %54 = vmatpush1.msra.mxu0 0.0
    %55 = vmatprep.subr.mxu0 0.0
    %56 = vmatpush1.msra.mxu0 0.0
    %57 = vmatprep.subr.mxu0 0.0
    %58 = vmatpush1.msra.mxu0 0.0
    %59 = vmatprep.subr.mxu0 0.0
    %60 = vmatpush1.msra.mxu0 0.0
    %61 = vmatprep.subr.mxu0 0.0
    %62 = vmatpush1.msra.mxu0 0.0
    %63 = vmatprep.subr.mxu0 0.0
    %64 = vmatpush1.msra.mxu0 0.0
    %65 = vmatprep.subr.mxu0 0.0
    %66 = vmatpush1.msra.mxu0 0.0
    %67 = vmatprep.subr.mxu0 0.0
    %68 = vmatpush1.msra.mxu0 0.0
    %69 = vmatprep.subr.mxu0 0.0
    %70 = vmatpush1.msra.mxu0 0.0
    %71 = vmatprep.subr.mxu0 0.0
    %72 = vmatpush1.msra.mxu0 0.0
    %73 = vmatprep.subr.mxu0 0.0
    %74 = vmatpush1.msra.mxu0 0.0
    %75 = vmatprep.subr.mxu0 0.0
    %76 = vmatpush1.msra.mxu0 0.0
    %77 = vmatprep.subr.mxu0 0.0
    %78 = vmatpush1.msra.mxu0 0.0
    %79 = vmatprep.subr.mxu0 0.0
    %80 = vmatpush1.msra.mxu0 0.0
    %81 = vmatprep.subr.mxu0 0.0
    %82 = vmatpush1.msra.mxu0 0.0
    %83 = vmatprep.subr.mxu0 0.0
    %84 = vmatpush1.msra.mxu0 0.0
    %85 = vmatprep.subr.mxu0 0.0
    %86 = vmatpush1.msra.mxu0 0.0
    %87 = vmatprep.subr.mxu0 0.0
    %88 = vmatpush1.msra.mxu0 0.0
    %89 = vmatprep.subr.mxu0 0.0
    %90 = vmatpush1.msra.mxu0 0.0
    %91 = vmatprep.subr.mxu0 0.0
    %92 = vmatpush1.msra.mxu0 0.0
    %93 = vmatprep.subr.mxu0 0.0
    %94 = vmatpush1.msra.mxu0 0.0
    %95 = vmatprep.subr.mxu0 0.0
    %96 = vmatpush1.msra.mxu0 0.0
    %97 = vmatprep.subr.mxu0 0.0
    %98 = vmatpush1.msra.mxu0 0.0
    %99 = vmatprep.subr.mxu0 0.0
    %100 = vmatpush1.msra.mxu0 0.0
    %101 = vmatprep.mubr.f32.mxu0 0.0
    %102 = vmatmul.mubr.f32.gmra.mrb[0].mxu0 %v35
    %v103 = vpop.f32.mrb[0].mxu0
    %v104 = vadd.f32 %v31, %v103
    %v105 = vpop.f32.mrb[0].mxu0
    %106 = vdwg.mxu0
    %v107 = vmax.f32 %v104, 0.0
    %v108 = vld [vmem:[%s3] sm:$0xff]
    %v109 = vld [vmem:[%s3 + $0x8] sm:$0x3]
    %v110 = vld [vmem:[%s4] sm:$0x1]
    %v112 = vlaneseq
    %v113 = vshrl.u32 %v112, 7
    %v114 = vsub.s32 0, %v113
    %v115 = vrot.slane %v110, %v114
    %vm117 = vcmask 80896
    %v119 = vsel %vm117, %v107, 0
    %vm121 = vcmask 1041408
    %v123 = vsel %vm121, %v109, 0
    %125 = vmatprep.subr.mxu0 0.0
    %126 = vmatpush1.msra.mxu0 %v108
    %127 = vmatprep.subr.mxu0 0.0
    %128 = vmatpush1.msra.mxu0 %v123
    %129 = vmatprep.subr.mxu0 0.0
    %130 = vmatpush1.msra.mxu0 0.0
    %131 = vmatprep.subr.mxu0 0.0
    %132 = vmatpush1.msra.mxu0 0.0
    %133 = vmatprep.subr.mxu0 0.0
    %134 = vmatpush1.msra.mxu0 0.0
    %135 = vmatprep.subr.mxu0 0.0
    %136 = vmatpush1.msra.mxu0 0.0
    %137 = vmatprep.subr.mxu0 0.0
    %138 = vmatpush1.msra.mxu0 0.0
    %139 = vmatprep.subr.mxu0 0.0
    %140 = vmatpush1.msra.mxu0 0.0
    %141 = vmatprep.subr.mxu0 0.0
    %142 = vmatpush1.msra.mxu0 0.0
    %143 = vmatprep.subr.mxu0 0.0
    %144 = vmatpush1.msra.mxu0 0.0
    %145 = vmatprep.subr.mxu0 0.0
    %146 = vmatpush1.msra.mxu0 0.0
    %147 = vmatprep.subr.mxu0 0.0
    %148 = vmatpush1.msra.mxu0 0.0
    %149 = vmatprep.subr.mxu0 0.0
    %150 = vmatpush1.msra.mxu0 0.0
    %151 = vmatprep.subr.mxu0 0.0
    %152 = vmatpush1.msra.mxu0 0.0
    %153 = vmatprep.subr.mxu0 0.0
    %154 = vmatpush1.msra.mxu0 0.0
    %155 = vmatprep.subr.mxu0 0.0
    %156 = vmatpush1.msra.mxu0 0.0
    %157 = vmatprep.subr.mxu0 0.0
    %158 = vmatpush1.msra.mxu0 0.0
    %159 = vmatprep.subr.mxu0 0.0
    %160 = vmatpush1.msra.mxu0 0.0
    %161 = vmatprep.subr.mxu0 0.0
    %162 = vmatpush1.msra.mxu0 0.0
    %163 = vmatprep.subr.mxu0 0.0
    %164 = vmatpush1.msra.mxu0 0.0
    %165 = vmatprep.subr.mxu0 0.0
    %166 = vmatpush1.msra.mxu0 0.0
    %167 = vmatprep.subr.mxu0 0.0
    %168 = vmatpush1.msra.mxu0 0.0
    %169 = vmatprep.subr.mxu0 0.0
    %170 = vmatpush1.msra.mxu0 0.0
    %171 = vmatprep.subr.mxu0 0.0
    %172 = vmatpush1.msra.mxu0 0.0
    %173 = vmatprep.subr.mxu0 0.0
    %174 = vmatpush1.msra.mxu0 0.0
    %175 = vmatprep.subr.mxu0 0.0
    %176 = vmatpush1.msra.mxu0 0.0
    %177 = vmatprep.subr.mxu0 0.0
    %178 = vmatpush1.msra.mxu0 0.0
    %179 = vmatprep.subr.mxu0 0.0
    %180 = vmatpush1.msra.mxu0 0.0
    %181 = vmatprep.subr.mxu0 0.0
    %182 = vmatpush1.msra.mxu0 0.0
    %183 = vmatprep.subr.mxu0 0.0
    %184 = vmatpush1.msra.mxu0 0.0
    %185 = vmatprep.subr.mxu0 0.0
    %186 = vmatpush1.msra.mxu0 0.0
    %187 = vmatprep.subr.mxu0 0.0
    %188 = vmatpush1.msra.mxu0 0.0
    %189 = vmatprep.mubr.f32.mxu0 0.0
    %190 = vmatmul.mubr.f32.gmra.mrb[0].mxu0 %v119
    %v191 = vpop.f32.mrb[0].mxu0
    %v192 = vadd.f32 %v115, %v191
    %v193 = vpop.f32.mrb[0].mxu0
    %194 = vdwg.mxu0
    %v195 = vmax.f32 %v192, 0.0
    %vm196 = vcmask 39936
    %197 = vst.msk [vmem:[#allocation2] sm:$0xff] %vm196, %v195
    // Predicated region
    $region22: #{tpu_custom_call.1} parent=1 // pred_check
      _
    $region23: #{tpu_custom_call.1} parent=1 // pred_check_branch
      %199 = sbr.rel (0) target = $region25
    $region24: #{tpu_custom_call.1} parent=1 // pred_region
      %s201 = ssub.s32 128, 128
      %202 = vsyncadd [#allocation3], %s201
      %s204 = sshll.u32 [#allocation2], 4
      %s205 = int_to_ptr.vmem [resolvable:$true] %s204
      %207 = dma.vmem_to_hbm [thread:$0]  %s205, 128, %s5, [#allocation3]
    $region25: #{tpu_custom_call.1} parent=1 // pred_fallthru
      _
    // Predicated region
    $region26: #{tpu_custom_call.1} parent=1 // pred_check
      _
    $region27: #{tpu_custom_call.1} parent=1 // pred_check_branch
      %209 = sbr.rel (0) target = $region29
    $region28: #{tpu_custom_call.1} parent=1 // pred_region
      %210 = dma.done [#allocation3], 128
    $region29: #{tpu_custom_call.1} parent=1 // pred_fallthru
      _
    %211 = vsyncpa [#allocation3], 1

</llo_original>
